<compile_context>
chip_gen: v5e
topology: v5e:2x2
jax: 0.10.0
libtpu: 0.0.40
codegen_flags: <defaults>
</compile_context>

<pallas_src>
import functools

import jax
import jax.numpy as jnp
from jax import lax
from jax.experimental import pallas as pl
from jax.experimental.pallas import tpu as pltpu


# ----------------------------------------------------------------------------
# Fused kernel: im2col build -> single MXU matmul -> batch stats -> BN -> ReLU
# ----------------------------------------------------------------------------
def _fused_conv_bn_relu_kernel(x_ref, band_ref, red_ref, gamma_ref, beta_ref, out_ref,
                               xcol_ref, *, N, H, Hout, WCin, KH, pad, count, eps):
    # x_ref:     (N, H, W*Cin)              bf16  unpadded input rows, (w, ci) packed on lanes
    # band_ref:  (KH*W*Cin, Wout*Cout)      bf16  banded weights (W padding folded in)
    # red_ref:   (Wout*Cout, Wout*Cout)     f32   0/1 channel reduce-and-broadcast matrix
    # gamma_ref: (1, Wout*Cout)             f32   gamma tiled per lane
    # beta_ref:  (1, Wout*Cout)             f32   beta tiled per lane
    # out_ref:   (N*Hout, Wout*Cout)        out dtype
    # xcol_ref:  (N*Hout, KH*W*Cin)         bf16  im2col scratch (H halo zeros folded in)

    # Build the im2col scratch with static slices only; zero only the halo row segments.
    for n in range(N):
        base = n * Hout
        for kh in range(KH):
            cl, ch = kh * WCin, (kh + 1) * WCin
            dst_lo = max(0, pad - kh)
            dst_hi = min(Hout, H + pad - kh)
            nrows = max(0, dst_hi - dst_lo)
            src_lo = dst_lo + kh - pad
            if dst_lo > 0:                                    # top halo rows -> zero
                xcol_ref[base:base + dst_lo, cl:ch] = jnp.zeros((dst_lo, WCin), xcol_ref.dtype)
            if nrows > 0:                                     # interior rows -> shifted copy
                xcol_ref[base + dst_lo:base + dst_lo + nrows, cl:ch] = \
                    x_ref[n, src_lo:src_lo + nrows, :]
            if dst_hi < Hout:                                 # bottom halo rows -> zero
                xcol_ref[base + dst_hi:base + Hout, cl:ch] = \
                    jnp.zeros((Hout - dst_hi, WCin), xcol_ref.dtype)

    # One MXU push: M = N*Hout, K = KH*W*Cin, Nmm = Wout*Cout, f32 accumulation.
    acc = jnp.dot(xcol_ref[...], band_ref[...], preferred_element_type=jnp.float32)

    # Training-mode BN statistics: sublane reduction over rows, then channel reduction over
    # the Wout positions packed on lanes via the 0/1 indicator matmul (reduce + broadcast).
    colsum = jnp.sum(acc, axis=0, keepdims=True)              # (1, lanes)
    colsq = jnp.sum(acc * acc, axis=0, keepdims=True)         # (1, lanes)
    ch_sum = jnp.dot(colsum, red_ref[...], preferred_element_type=jnp.float32)
    ch_sq = jnp.dot(colsq, red_ref[...], preferred_element_type=jnp.float32)

    inv_count = 1.0 / count
    mean = ch_sum * inv_count
    # NOTE: E[x^2]-E[x]^2 can lose precision at huge counts; clamped here.
    # TODO(synk): switch to a shifted/two-pass variance at production sizes.
    var = jnp.maximum(ch_sq * inv_count - mean * mean, 0.0)
    inv_std = lax.rsqrt(var + eps)
    scale = gamma_ref[...] * inv_std
    shift = beta_ref[...] - mean * scale

    out_ref[...] = jnp.maximum(acc * scale + shift, 0.0).astype(out_ref.dtype)


# ----------------------------------------------------------------------------
# Wrapper-side operand packing (tiny, traced once)
# ----------------------------------------------------------------------------
def _build_banded_weight(weight_oihw, W, Wout, pad, dtype):
    """band[kh*W*Cin + wp*Cin + ci, w*Cout + co] = weight[co, ci, kh, wp-w+pad] (0 off-band)."""
    Cout, Cin, KH, KW = weight_oihw.shape
    w_t = jnp.transpose(weight_oihw, (2, 3, 1, 0))              # (KH, KW, Cin, Cout)
    wp = jnp.arange(W)[:, None]                                 # input column index
    wo = jnp.arange(Wout)[None, :]                              # output column index
    kw_rel = wp - wo + pad                                      # (W, Wout)
    valid = (kw_rel >= 0) & (kw_rel < KW)
    kw_c = jnp.clip(kw_rel, 0, KW - 1)
    band = w_t[:, kw_c, :, :]                                   # (KH, W, Wout, Cin, Cout)
    band = jnp.where(valid[None, :, :, None, None], band, 0.0)
    band = jnp.transpose(band, (0, 1, 3, 2, 4))                 # (KH, W, Cin, Wout, Cout)
    return band.reshape(KH * W * Cin, Wout * Cout).astype(dtype)


# ----------------------------------------------------------------------------
# ConvBnRelu forward
# ----------------------------------------------------------------------------
def conv_bn_relu(x_nchw, weight_oihw, bias, gamma, beta, *, padding=1, eps=1e-5,
                 mxu_dtype=jnp.bfloat16, out_dtype=jnp.float32):
    """ConvBnRelu forward. x_nchw: (N, Cin, H, W). Returns (N, Cout, Hout, Wout) out_dtype."""
    N, Cin, H, W = x_nchw.shape
    Cout, Cin_w, KH, KW = weight_oihw.shape
    assert Cin == Cin_w, "groups != 1 not supported"
    Hout = H + 2 * padding - KH + 1      # stride=1, dilation=1
    Wout = W + 2 * padding - KW + 1
    assert Hout > 0 and Wout > 0
    lanes = Wout * Cout                  # conv-output lane width (128 for the toy config)
    WCin = W * Cin
    Kdim = KH * WCin
    M_rows = N * Hout
    # NOTE: lanes that are not a multiple of 128 still work but produce masked stores (perf).

    # --- glue: layout + packed operands (plain JAX, tiny) ---
    x_rows = jnp.transpose(x_nchw, (0, 2, 3, 1)).astype(mxu_dtype).reshape(N, H, WCin)
    band = _build_banded_weight(weight_oihw.astype(jnp.float32), W, Wout, padding, mxu_dtype)
    idx = jnp.arange(lanes)
    red = (idx[:, None] % Cout == idx[None, :] % Cout).astype(jnp.float32)
    gamma_row = jnp.tile(gamma.astype(jnp.float32), Wout).reshape(1, lanes)
    beta_row = jnp.tile(beta.astype(jnp.float32), Wout).reshape(1, lanes)
    # Conv bias cancels exactly under training-mode BN ((y+b)-mean(y+b) == y-mean(y)),
    # so it is intentionally not applied in the kernel.
    del bias

    # --- VMEM budget (fused path keeps everything resident; gated to small problems) ---
    bf16_b, f32_b = 2, 4
    out_b = jnp.dtype(out_dtype).itemsize
    block_bytes = (N * H * WCin * bf16_b            # x
                   + Kdim * lanes * bf16_b          # band
                   + lanes * lanes * f32_b          # reduce matrix
                   + 2 * lanes * f32_b              # gamma/beta rows
                   + M_rows * lanes * out_b)        # output
    scratch_bytes = M_rows * Kdim * bf16_b
    vmem_need = 2 * block_bytes + scratch_bytes     # operands are double-buffered by Pallas
    assert vmem_need <= 24 * 1024 * 1024, (
        "fused ConvBnRelu path requires the whole activation resident in VMEM; "
        "use a tiled two-pass variant for larger shapes")
    vmem_limit = int(min(max(2 * vmem_need, 4 * 1024 * 1024), 32 * 1024 * 1024))

    cost = pl.CostEstimate(
        flops=2 * M_rows * Kdim * lanes + 4 * lanes * lanes + 10 * M_rows * lanes,
        transcendentals=lanes,
        bytes_accessed=int(block_bytes),
    )

    kern = functools.partial(_fused_conv_bn_relu_kernel, N=N, H=H, Hout=Hout, WCin=WCin,
                             KH=KH, pad=padding, count=float(N * Hout * Wout), eps=float(eps))

    out_flat = pl.pallas_call(
        kern,
        out_shape=jax.ShapeDtypeStruct((M_rows, lanes), out_dtype),
        grid_spec=pltpu.PrefetchScalarGridSpec(
            num_scalar_prefetch=0,
            grid=(1,),
            in_specs=[
                pl.BlockSpec((N, H, WCin), lambda i: (0, 0, 0)),
                pl.BlockSpec((Kdim, lanes), lambda i: (0, 0)),
                pl.BlockSpec((lanes, lanes), lambda i: (0, 0)),
                pl.BlockSpec((1, lanes), lambda i: (0, 0)),
                pl.BlockSpec((1, lanes), lambda i: (0, 0)),
            ],
            out_specs=pl.BlockSpec((M_rows, lanes), lambda i: (0, 0)),
            scratch_shapes=[pltpu.VMEM((M_rows, Kdim), mxu_dtype)],
        ),
        compiler_params=pltpu.CompilerParams(
            dimension_semantics=("arbitrary",),
            vmem_limit_bytes=vmem_limit,
        ),
        cost_estimate=cost,
    )(x_rows, band, red, gamma_row, beta_row)

    # back to PyTorch NCHW convention
    return jnp.transpose(out_flat.reshape(N, Hout, Wout, Cout), (0, 3, 1, 2))


# ----------------------------------------------------------------------------
# Pure-JAX reference (bf16 MXU inputs with f32 accumulation, f32 BN/ReLU) --
# matches the PyTorch ConvBnRelu forward (BatchNorm2d in training mode).
# ----------------------------------------------------------------------------
def _reference(x, w, b, gamma, beta, *, padding=1, eps=1e-5):
    y = lax.conv_general_dilated(
        x.astype(jnp.bfloat16), w.astype(jnp.bfloat16),
        window_strides=(1, 1),
        padding=((padding, padding), (padding, padding)),
        dimension_numbers=("NCHW", "OIHW", "NCHW"),
        preferred_element_type=jnp.float32,
    ) + b[None, :, None, None]
    mean = jnp.mean(y, axis=(0, 2, 3), keepdims=True)
    var = jnp.mean((y - mean) ** 2, axis=(0, 2, 3), keepdims=True)
    out = gamma[None, :, None, None] * (y - mean) * lax.rsqrt(var + eps) \
        + beta[None, :, None, None]
    return jnp.maximum(out, 0.0)


if __name__ == "__main__":
    # ConvBnRelu(in_channels=4, out_channels=8, kernel_size=3, padding=1)
    N, Cin, H, W = 2, 4, 16, 16
    Cout, KH, KW = 8, 3, 3

    key = jax.random.PRNGKey(0)
    k_x, k_w, k_b, k_g, k_beta = jax.random.split(key, 5)
    x = jax.random.normal(k_x, (N, Cin, H, W), jnp.float32)
    weight = jax.random.normal(k_w, (Cout, Cin, KH, KW), jnp.float32) * 0.1
    bias = jax.random.normal(k_b, (Cout,), jnp.float32) * 0.1
    gamma = 1.0 + 0.1 * jax.random.normal(k_g, (Cout,), jnp.float32)
    beta = 0.1 * jax.random.normal(k_beta, (Cout,), jnp.float32)

    fwd = jax.jit(functools.partial(conv_bn_relu, padding=1))
    out = jax.block_until_ready(fwd(x, weight, bias, gamma, beta))

    ref = _reference(x, weight, bias, gamma, beta, padding=1)
    # Tolerance sized for the intentional bf16 MXU inputs (f32 accumulation everywhere else).
    if not jnp.allclose(out, ref, atol=5e-2, rtol=5e-2):
        max_err = jnp.max(jnp.abs(out - ref))
        raise AssertionError(f"Pallas ConvBnRelu mismatch vs reference (max abs err {max_err})")

    print("KERNEL_OK")
</pallas_src>

<mosaic_0001>
module attributes {stable_mosaic.version = 11 : i64} {
  func.func @_fused_conv_bn_relu_kernel(%arg0: i32, %arg1: memref<2x16x64xbf16, #tpu.memory_space<vmem>>, %arg2: memref<192x128xbf16, #tpu.memory_space<vmem>>, %arg3: memref<128x128xf32, #tpu.memory_space<vmem>>, %arg4: memref<1x128xf32, #tpu.memory_space<vmem>>, %arg5: memref<1x128xf32, #tpu.memory_space<vmem>>, %arg6: memref<32x128xf32, #tpu.memory_space<vmem>>, %arg7: memref<32x192xbf16, #tpu.memory_space<vmem>>) attributes {dimension_semantics = [#tpu.dimension_semantics<arbitrary>], iteration_bounds = array<i64: 1>, scalar_prefetch = 0 : i64, scratch_operands = 1 : i64, tpu.core_type = #tpu.core_type<tc>, window_params = [{pipeline_mode = #tpu.pipeline_mode<synchronous>, transform_indices = @transform_0, window_bounds = array<i64: 2, 16, 64>}, {pipeline_mode = #tpu.pipeline_mode<synchronous>, transform_indices = @transform_1, window_bounds = array<i64: 192, 128>}, {pipeline_mode = #tpu.pipeline_mode<synchronous>, transform_indices = @transform_2, window_bounds = array<i64: 128, 128>}, {pipeline_mode = #tpu.pipeline_mode<synchronous>, transform_indices = @transform_3, window_bounds = array<i64: 1, 128>}, {pipeline_mode = #tpu.pipeline_mode<synchronous>, transform_indices = @transform_4, window_bounds = array<i64: 1, 128>}, {pipeline_mode = #tpu.pipeline_mode<synchronous>, transform_indices = @transform_5, window_bounds = array<i64: 32, 128>}]} {
    %cst = arith.constant 0.000000e+00 : bf16
    %0 = vector.broadcast %cst : bf16 to vector<1x64xbf16>
    %c0 = arith.constant 0 : index
    %c0_0 = arith.constant 0 : index
    %1 = vector.load %arg7[%c0, %c0_0] : memref<32x192xbf16, #tpu.memory_space<vmem>>, vector<1x64xbf16>
    tpu.vector_store %arg7[%c0, %c0_0], %0 {strides = array<i32>} : memref<32x192xbf16, #tpu.memory_space<vmem>>, vector<1x64xbf16>,
    %c0_1 = arith.constant 0 : index
    %c0_2 = arith.constant 0 : index
    %c0_3 = arith.constant 0 : index
    %2 = vector.load %arg1[%c0_1, %c0_2, %c0_3] : memref<2x16x64xbf16, #tpu.memory_space<vmem>>, vector<1x15x64xbf16>
    %3 = vector.shape_cast %2 : vector<1x15x64xbf16> to vector<15x64xbf16>
    %c1 = arith.constant 1 : index
    %c0_4 = arith.constant 0 : index
    %4 = vector.load %arg7[%c1, %c0_4] : memref<32x192xbf16, #tpu.memory_space<vmem>>, vector<15x64xbf16>
    tpu.vector_store %arg7[%c1, %c0_4], %3 {strides = array<i32>} : memref<32x192xbf16, #tpu.memory_space<vmem>>, vector<15x64xbf16>,
    %c0_5 = arith.constant 0 : index
    %c0_6 = arith.constant 0 : index
    %c0_7 = arith.constant 0 : index
    %5 = vector.load %arg1[%c0_5, %c0_6, %c0_7] : memref<2x16x64xbf16, #tpu.memory_space<vmem>>, vector<1x16x64xbf16>
    %6 = vector.shape_cast %5 : vector<1x16x64xbf16> to vector<16x64xbf16>
    %c0_8 = arith.constant 0 : index
    %c64 = arith.constant 64 : index
    %7 = vector.load %arg7[%c0_8, %c64] : memref<32x192xbf16, #tpu.memory_space<vmem>>, vector<16x64xbf16>
    tpu.vector_store %arg7[%c0_8, %c64], %6 {strides = array<i32>} : memref<32x192xbf16, #tpu.memory_space<vmem>>, vector<16x64xbf16>,
    %c0_9 = arith.constant 0 : index
    %c1_10 = arith.constant 1 : index
    %c0_11 = arith.constant 0 : index
    %8 = vector.load %arg1[%c0_9, %c1_10, %c0_11] : memref<2x16x64xbf16, #tpu.memory_space<vmem>>, vector<1x15x64xbf16>
    %9 = vector.shape_cast %8 : vector<1x15x64xbf16> to vector<15x64xbf16>
    %c0_12 = arith.constant 0 : index
    %c128 = arith.constant 128 : index
    %10 = vector.load %arg7[%c0_12, %c128] : memref<32x192xbf16, #tpu.memory_space<vmem>>, vector<15x64xbf16>
    tpu.vector_store %arg7[%c0_12, %c128], %9 {strides = array<i32>} : memref<32x192xbf16, #tpu.memory_space<vmem>>, vector<15x64xbf16>,
    %cst_13 = arith.constant 0.000000e+00 : bf16
    %11 = vector.broadcast %cst_13 : bf16 to vector<1x64xbf16>
    %c15 = arith.constant 15 : index
    %c128_14 = arith.constant 128 : index
    %12 = vector.load %arg7[%c15, %c128_14] : memref<32x192xbf16, #tpu.memory_space<vmem>>, vector<1x64xbf16>
    tpu.vector_store %arg7[%c15, %c128_14], %11 {strides = array<i32>} : memref<32x192xbf16, #tpu.memory_space<vmem>>, vector<1x64xbf16>,
    %cst_15 = arith.constant 0.000000e+00 : bf16
    %13 = vector.broadcast %cst_15 : bf16 to vector<1x64xbf16>
    %c16 = arith.constant 16 : index
    %c0_16 = arith.constant 0 : index
    %14 = vector.load %arg7[%c16, %c0_16] : memref<32x192xbf16, #tpu.memory_space<vmem>>, vector<1x64xbf16>
    tpu.vector_store %arg7[%c16, %c0_16], %13 {strides = array<i32>} : memref<32x192xbf16, #tpu.memory_space<vmem>>, vector<1x64xbf16>,
    %c1_17 = arith.constant 1 : index
    %c0_18 = arith.constant 0 : index
    %c0_19 = arith.constant 0 : index
    %15 = vector.load %arg1[%c1_17, %c0_18, %c0_19] : memref<2x16x64xbf16, #tpu.memory_space<vmem>>, vector<1x15x64xbf16>
    %16 = vector.shape_cast %15 : vector<1x15x64xbf16> to vector<15x64xbf16>
    %c17 = arith.constant 17 : index
    %c0_20 = arith.constant 0 : index
    %17 = vector.load %arg7[%c17, %c0_20] : memref<32x192xbf16, #tpu.memory_space<vmem>>, vector<15x64xbf16>
    tpu.vector_store %arg7[%c17, %c0_20], %16 {strides = array<i32>} : memref<32x192xbf16, #tpu.memory_space<vmem>>, vector<15x64xbf16>,
    %c1_21 = arith.constant 1 : index
    %c0_22 = arith.constant 0 : index
    %c0_23 = arith.constant 0 : index
    %18 = vector.load %arg1[%c1_21, %c0_22, %c0_23] : memref<2x16x64xbf16, #tpu.memory_space<vmem>>, vector<1x16x64xbf16>
    %19 = vector.shape_cast %18 : vector<1x16x64xbf16> to vector<16x64xbf16>
    %c16_24 = arith.constant 16 : index
    %c64_25 = arith.constant 64 : index
    %20 = vector.load %arg7[%c16_24, %c64_25] : memref<32x192xbf16, #tpu.memory_space<vmem>>, vector<16x64xbf16>
    tpu.vector_store %arg7[%c16_24, %c64_25], %19 {strides = array<i32>} : memref<32x192xbf16, #tpu.memory_space<vmem>>, vector<16x64xbf16>,
    %c1_26 = arith.constant 1 : index
    %c1_27 = arith.constant 1 : index
    %c0_28 = arith.constant 0 : index
    %21 = vector.load %arg1[%c1_26, %c1_27, %c0_28] : memref<2x16x64xbf16, #tpu.memory_space<vmem>>, vector<1x15x64xbf16>
    %22 = vector.shape_cast %21 : vector<1x15x64xbf16> to vector<15x64xbf16>
    %c16_29 = arith.constant 16 : index
    %c128_30 = arith.constant 128 : index
    %23 = vector.load %arg7[%c16_29, %c128_30] : memref<32x192xbf16, #tpu.memory_space<vmem>>, vector<15x64xbf16>
    tpu.vector_store %arg7[%c16_29, %c128_30], %22 {strides = array<i32>} : memref<32x192xbf16, #tpu.memory_space<vmem>>, vector<15x64xbf16>,
    %cst_31 = arith.constant 0.000000e+00 : bf16
    %24 = vector.broadcast %cst_31 : bf16 to vector<1x64xbf16>
    %c31 = arith.constant 31 : index
    %c128_32 = arith.constant 128 : index
    %25 = vector.load %arg7[%c31, %c128_32] : memref<32x192xbf16, #tpu.memory_space<vmem>>, vector<1x64xbf16>
    tpu.vector_store %arg7[%c31, %c128_32], %24 {strides = array<i32>} : memref<32x192xbf16, #tpu.memory_space<vmem>>, vector<1x64xbf16>,
    %c0_33 = arith.constant 0 : index
    %c0_34 = arith.constant 0 : index
    %26 = vector.load %arg7[%c0_33, %c0_34] : memref<32x192xbf16, #tpu.memory_space<vmem>>, vector<32x192xbf16>
    %c0_35 = arith.constant 0 : index
    %c0_36 = arith.constant 0 : index
    %27 = vector.load %arg2[%c0_35, %c0_36] : memref<192x128xbf16, #tpu.memory_space<vmem>>, vector<192x128xbf16>
    %cst_37 = arith.constant dense<0.000000e+00> : vector<32x128xf32>
    %28 = tpu.matmul %26, %27, %cst_37 {dimension_numbers = #tpu.dot_dimension_numbers<[1], [0], [0], [1], [0, 0, 1, 1], [], []>} : vector<32x192xbf16>, vector<192x128xbf16>, vector<32x128xf32> -> vector<32x128xf32>
    %cst_38 = arith.constant dense<0.000000e+00> : vector<128xf32>
    %29 = vector.multi_reduction <add>, %28, %cst_38 [0] : vector<32x128xf32> to vector<128xf32>
    %30 = vector.shape_cast %29 : vector<128xf32> to vector<1x128xf32>
    %31 = arith.mulf %28, %28 : vector<32x128xf32>
    %cst_39 = arith.constant dense<0.000000e+00> : vector<128xf32>
    %32 = vector.multi_reduction <add>, %31, %cst_39 [0] : vector<32x128xf32> to vector<128xf32>
    %33 = vector.shape_cast %32 : vector<128xf32> to vector<1x128xf32>
    %c0_40 = arith.constant 0 : index
    %c0_41 = arith.constant 0 : index
    %34 = vector.load %arg3[%c0_40, %c0_41] : memref<128x128xf32, #tpu.memory_space<vmem>>, vector<128x128xf32>
    %cst_42 = arith.constant dense<0.000000e+00> : vector<1x128xf32>
    %35 = tpu.matmul %30, %34, %cst_42 {dimension_numbers = #tpu.dot_dimension_numbers<[1], [0], [0], [1], [0, 0, 1, 1], [], []>} : vector<1x128xf32>, vector<128x128xf32>, vector<1x128xf32> -> vector<1x128xf32>
    %c0_43 = arith.constant 0 : index
    %c0_44 = arith.constant 0 : index
    %36 = vector.load %arg3[%c0_43, %c0_44] : memref<128x128xf32, #tpu.memory_space<vmem>>, vector<128x128xf32>
    %cst_45 = arith.constant dense<0.000000e+00> : vector<1x128xf32>
    %37 = tpu.matmul %33, %36, %cst_45 {dimension_numbers = #tpu.dot_dimension_numbers<[1], [0], [0], [1], [0, 0, 1, 1], [], []>} : vector<1x128xf32>, vector<128x128xf32>, vector<1x128xf32> -> vector<1x128xf32>
    %cst_46 = arith.constant 0.001953125 : f32
    %38 = vector.broadcast %cst_46 : f32 to vector<1x128xf32>
    %39 = arith.mulf %35, %38 : vector<1x128xf32>
    %cst_47 = arith.constant 0.001953125 : f32
    %40 = vector.broadcast %cst_47 : f32 to vector<1x128xf32>
    %41 = arith.mulf %37, %40 : vector<1x128xf32>
    %42 = arith.mulf %39, %39 : vector<1x128xf32>
    %43 = arith.subf %41, %42 : vector<1x128xf32>
    %cst_48 = arith.constant 0.000000e+00 : f32
    %44 = vector.broadcast %cst_48 : f32 to vector<1x128xf32>
    %45 = arith.maximumf %43, %44 : vector<1x128xf32>
    %cst_49 = arith.constant 9.99999974E-6 : f32
    %46 = vector.broadcast %cst_49 : f32 to vector<1x128xf32>
    %47 = arith.addf %45, %46 : vector<1x128xf32>
    %48 = math.rsqrt %47 : vector<1x128xf32>
    %c0_50 = arith.constant 0 : index
    %c0_51 = arith.constant 0 : index
    %49 = vector.load %arg4[%c0_50, %c0_51] : memref<1x128xf32, #tpu.memory_space<vmem>>, vector<1x128xf32>
    %50 = arith.mulf %49, %48 : vector<1x128xf32>
    %c0_52 = arith.constant 0 : index
    %c0_53 = arith.constant 0 : index
    %51 = vector.load %arg5[%c0_52, %c0_53] : memref<1x128xf32, #tpu.memory_space<vmem>>, vector<1x128xf32>
    %52 = arith.mulf %39, %50 : vector<1x128xf32>
    %53 = arith.subf %51, %52 : vector<1x128xf32>
    %54 = vector.broadcast %50 : vector<1x128xf32> to vector<32x128xf32>
    %55 = arith.mulf %28, %54 : vector<32x128xf32>
    %56 = vector.broadcast %53 : vector<1x128xf32> to vector<32x128xf32>
    %57 = arith.addf %55, %56 : vector<32x128xf32>
    %cst_54 = arith.constant 0.000000e+00 : f32
    %58 = vector.broadcast %cst_54 : f32 to vector<32x128xf32>
    %59 = arith.maximumf %57, %58 : vector<32x128xf32>
    %c0_55 = arith.constant 0 : index
    %c0_56 = arith.constant 0 : index
    %60 = vector.load %arg6[%c0_55, %c0_56] : memref<32x128xf32, #tpu.memory_space<vmem>>, vector<32x128xf32>
    tpu.vector_store %arg6[%c0_55, %c0_56], %59 {strides = array<i32>} : memref<32x128xf32, #tpu.memory_space<vmem>>, vector<32x128xf32>,
    return
  }
  func.func @transform_0(%arg0: i32) -> (i32, i32, i32) {
    %c0_i32 = arith.constant 0 : i32
    %c0_i32_0 = arith.constant 0 : i32
    %c0_i32_1 = arith.constant 0 : i32
    %c0_i32_2 = arith.constant 0 : i32
    return %c0_i32, %c0_i32_0, %c0_i32_1 : i32, i32, i32
  }
  func.func @transform_1(%arg0: i32) -> (i32, i32) {
    %c0_i32 = arith.constant 0 : i32
    %c0_i32_0 = arith.constant 0 : i32
    %c0_i32_1 = arith.constant 0 : i32
    return %c0_i32, %c0_i32_0 : i32, i32
  }
  func.func @transform_2(%arg0: i32) -> (i32, i32) {
    %c0_i32 = arith.constant 0 : i32
    %c0_i32_0 = arith.constant 0 : i32
    %c0_i32_1 = arith.constant 0 : i32
    return %c0_i32, %c0_i32_0 : i32, i32
  }
  func.func @transform_3(%arg0: i32) -> (i32, i32) {
    %c0_i32 = arith.constant 0 : i32
    %c0_i32_0 = arith.constant 0 : i32
    %c0_i32_1 = arith.constant 0 : i32
    return %c0_i32, %c0_i32_0 : i32, i32
  }
  func.func @transform_4(%arg0: i32) -> (i32, i32) {
    %c0_i32 = arith.constant 0 : i32
    %c0_i32_0 = arith.constant 0 : i32
    %c0_i32_1 = arith.constant 0 : i32
    return %c0_i32, %c0_i32_0 : i32, i32
  }
  func.func @transform_5(%arg0: i32) -> (i32, i32) {
    %c0_i32 = arith.constant 0 : i32
    %c0_i32_0 = arith.constant 0 : i32
    %c0_i32_1 = arith.constant 0 : i32
    return %c0_i32, %c0_i32_0 : i32, i32
  }
}

</mosaic_0001>

<llo_original>
// kernel: tile.13
$region0: #{tile.13}
  #allocation0 [shape = 's32[1]{0}', space=sflag, size = 0x4, scoped, tag = 'scoped memory for tile.13']
  %s0 = inlined_call_operand.vmem [shape: f32[8], index: 0, kind: input, shape index: {}]
  %s1 = inlined_call_operand.vmem [shape: f32[16,8], index: 1, kind: output, shape index: {}]
  // Predicated region
  $region2: #{tile.13} parent=0 // pred_check
    _
  $region3: #{tile.13} parent=0 // pred_check_branch
    %3 = sbr.rel (0) target = $region5
  $region4: #{tile.13} parent=0 // pred_region
    _
  $region5: #{tile.13} parent=0 // pred_fallthru
    _
  %v4 = vld [vmem:[%s0] ss:$0 sm:$0xff]
  %5 = vst [vmem:[%s1] sm:$0xff] %v4
  %s6 = scalar_lea.vmem %s1, 8
  %7 = vst [vmem:[%s6] sm:$0xff] %v4

// kernel: tile.14
$region0: #{tile.14}
  %s0 = inlined_call_operand.vmem [shape: f32[16,8], index: 0, kind: input, shape index: {}]
  %s1 = inlined_call_operand.vmem [shape: f32[1,128], index: 1, kind: output, shape index: {}]
  $region1: #{tile.14} parent=0
    #allocation0 [shape = 'u8[4096]{0}', space=vmem, size = 0x1000, scoped, tag = 'scoped mem for output reshape']
    %v2 = vld [vmem:[%s0] sm:$0x1]
    %vm3 = vcmask 64512
    %4 = vst.msk [vmem:[#allocation0] sm:$0x1] %vm3, %v2
    %s5 = scalar_lea.vmem %s0, 15
    %v6 = vld [vmem:[%s5] sm:$0x1]
    %7 = vrot.lane.b32.xlu0 %v6, 120
    %v8 = vpop.permute.xlu0 %7
    %vm9 = vcmask 1048512
    %10 = vst.msk [vmem:[#allocation0] sm:$0x1] %vm9, %v8
    %s11 = scalar_lea.vmem %s0, 14
    %v12 = vld [vmem:[%s11] sm:$0x1]
    %13 = vrot.lane.b32.xlu0 %v12, 112
    %v14 = vpop.permute.xlu0 %13
    %vm15 = vcmask 982912
    %16 = vst.msk [vmem:[#allocation0] sm:$0x1] %vm15, %v14
    %s17 = scalar_lea.vmem %s0, 13
    %v18 = vld [vmem:[%s17] sm:$0x1]
    %19 = vrot.lane.b32.xlu0 %v18, 104
    %v20 = vpop.permute.xlu0 %19
    %vm21 = vcmask 917312
    %22 = vst.msk [vmem:[#allocation0] sm:$0x1] %vm21, %v20
    %s23 = scalar_lea.vmem %s0, 12
    %v24 = vld [vmem:[%s23] sm:$0x1]
    %25 = vrot.lane.b32.xlu0 %v24, 96
    %v26 = vpop.permute.xlu0 %25
    %vm27 = vcmask 851712
    %28 = vst.msk [vmem:[#allocation0] sm:$0x1] %vm27, %v26
    %s29 = scalar_lea.vmem %s0, 11
    %v30 = vld [vmem:[%s29] sm:$0x1]
    %31 = vrot.lane.b32.xlu0 %v30, 88
    %v32 = vpop.permute.xlu0 %31
    %vm33 = vcmask 786112
    %34 = vst.msk [vmem:[#allocation0] sm:$0x1] %vm33, %v32
    %s35 = scalar_lea.vmem %s0, 10
    %v36 = vld [vmem:[%s35] sm:$0x1]
    %37 = vrot.lane.b32.xlu0 %v36, 80
    %v38 = vpop.permute.xlu0 %37
    %vm39 = vcmask 720512
    %40 = vst.msk [vmem:[#allocation0] sm:$0x1] %vm39, %v38
    %s41 = scalar_lea.vmem %s0, 9
    %v42 = vld [vmem:[%s41] sm:$0x1]
    %43 = vrot.lane.b32.xlu0 %v42, 72
    %v44 = vpop.permute.xlu0 %43
    %vm45 = vcmask 654912
    %46 = vst.msk [vmem:[#allocation0] sm:$0x1] %vm45, %v44
    %s47 = scalar_lea.vmem %s0, 8
    %v48 = vld [vmem:[%s47] sm:$0x1]
    %49 = vrot.lane.b32.xlu0 %v48, 64
    %v50 = vpop.permute.xlu0 %49
    %vm51 = vcmask 589312
    %52 = vst.msk [vmem:[#allocation0] sm:$0x1] %vm51, %v50
    %s53 = scalar_lea.vmem %s0, 7
    %v54 = vld [vmem:[%s53] sm:$0x1]
    %55 = vrot.lane.b32.xlu0 %v54, 56
    %v56 = vpop.permute.xlu0 %55
    %vm57 = vcmask 523712
    %58 = vst.msk [vmem:[#allocation0] sm:$0x1] %vm57, %v56
    %s59 = scalar_lea.vmem %s0, 6
    %v60 = vld [vmem:[%s59] sm:$0x1]
    %61 = vrot.lane.b32.xlu0 %v60, 48
    %v62 = vpop.permute.xlu0 %61
    %vm63 = vcmask 458112
    %64 = vst.msk [vmem:[#allocation0] sm:$0x1] %vm63, %v62
    %s65 = scalar_lea.vmem %s0, 5
    %v66 = vld [vmem:[%s65] sm:$0x1]
    %67 = vrot.lane.b32.xlu0 %v66, 40
    %v68 = vpop.permute.xlu0 %67
    %vm69 = vcmask 392512
    %70 = vst.msk [vmem:[#allocation0] sm:$0x1] %vm69, %v68
    %s71 = scalar_lea.vmem %s0, 4
    %v72 = vld [vmem:[%s71] sm:$0x1]
    %73 = vrot.lane.b32.xlu0 %v72, 32
    %v74 = vpop.permute.xlu0 %73
    %vm75 = vcmask 326912
    %76 = vst.msk [vmem:[#allocation0] sm:$0x1] %vm75, %v74
    %s77 = scalar_lea.vmem %s0, 3
    %v78 = vld [vmem:[%s77] sm:$0x1]
    %79 = vrot.lane.b32.xlu0 %v78, 24
    %v80 = vpop.permute.xlu0 %79
    %vm81 = vcmask 261312
    %82 = vst.msk [vmem:[#allocation0] sm:$0x1] %vm81, %v80
    %s83 = scalar_lea.vmem %s0, 2
    %v84 = vld [vmem:[%s83] sm:$0x1]
    %85 = vrot.lane.b32.xlu0 %v84, 16
    %v86 = vpop.permute.xlu0 %85
    %vm87 = vcmask 195712
    %88 = vst.msk [vmem:[#allocation0] sm:$0x1] %vm87, %v86
    %s89 = scalar_lea.vmem %s0, 1
    %v90 = vld [vmem:[%s89] sm:$0x1]
    %91 = vrot.lane.b32.xlu0 %v90, 8
    %v92 = vpop.permute.xlu0 %91
    %vm93 = vcmask 130112
    %94 = vst.msk [vmem:[#allocation0] sm:$0x1] %vm93, %v92
    %s96 = ssub.s32 2, 1
    %v97 = vld [vmem:[#allocation0] sm:%s96]
    %s99 = ssub.s32 2, 1
    %100 = vst [vmem:[%s1] sm:%s99] %v97

// kernel: conv_bn_relu.1
$region0: #{conv_bn_relu.1}
  #allocation0 [shape = 'u32[]', space=smem, size = 0x4, offset = 0x4, fixed_abs, tag = 'smem constant byte address 0x4 - core index']
  #allocation1 [shape = 'u32[72,128]{1,0:T(1,128)}', space=vmem, size = 0x9000, scoped, tag = 'internal scratch']
  #allocation2 [shape = 'bf16[32,192]{1,0:T(8,128)(2,1)}', space=vmem, size = 0x4000, scoped, tag = 'scratch operand']
  %s0 = inlined_call_operand.vmem [shape: bf16[2,16,64], index: 0, kind: input, shape index: {}]
  %s1 = inlined_call_operand.vmem [shape: bf16[192,128], index: 1, kind: input, shape index: {}]
  %s2 = inlined_call_operand.vmem [shape: f32[128,128], index: 2, kind: input, shape index: {}]
  %s3 = inlined_call_operand.vmem [shape: f32[1,128], index: 3, kind: input, shape index: {}]
  %s4 = inlined_call_operand.vmem [shape: f32[1,128], index: 4, kind: input, shape index: {}]
  %s5 = inlined_call_operand.vmem [shape: f32[32,128], index: 5, kind: output, shape index: {}]
  %s6 = sld [smem:[#allocation0]]
  $region30: #{conv_bn_relu.1} parent=0
    _
  %s8 = ssub.s32 1, %s6
  %s9 = scalar_select 0, %s8, %s6
  // Predicated region
  $region2: #{conv_bn_relu.1} parent=0 // pred_check
    _
  $region3: #{conv_bn_relu.1} parent=0 // pred_check_branch
    %11 = sbr.rel (0) target = $region5
  $region4: #{conv_bn_relu.1} parent=0 // pred_region
    _
  $region5: #{conv_bn_relu.1} parent=0 // pred_fallthru
    _
  // Predicated region
  $region6: #{conv_bn_relu.1} parent=0 // pred_check
    _
  $region7: #{conv_bn_relu.1} parent=0 // pred_check_branch
    %13 = sbr.rel (0) target = $region9
  $region8: #{conv_bn_relu.1} parent=0 // pred_region
    _
  $region9: #{conv_bn_relu.1} parent=0 // pred_fallthru
    _
  // Predicated region
  $region10: #{conv_bn_relu.1} parent=0 // pred_check
    _
  $region11: #{conv_bn_relu.1} parent=0 // pred_check_branch
    %15 = sbr.rel (0) target = $region13
  $region12: #{conv_bn_relu.1} parent=0 // pred_region
    _
  $region13: #{conv_bn_relu.1} parent=0 // pred_fallthru
    _
  // Predicated region
  $region14: #{conv_bn_relu.1} parent=0 // pred_check
    _
  $region15: #{conv_bn_relu.1} parent=0 // pred_check_branch
    %17 = sbr.rel (0) target = $region17
  $region16: #{conv_bn_relu.1} parent=0 // pred_region
    _
  $region17: #{conv_bn_relu.1} parent=0 // pred_fallthru
    _
  // Predicated region
  $region18: #{conv_bn_relu.1} parent=0 // pred_check
    _
  $region19: #{conv_bn_relu.1} parent=0 // pred_check_branch
    %19 = sbr.rel (0) target = $region21
  $region20: #{conv_bn_relu.1} parent=0 // pred_region
    _
  $region21: #{conv_bn_relu.1} parent=0 // pred_fallthru
    _
  %vm21 = vcmask 516096
  %vm22 = vsmask.f32 256
  %vm23 = vmand %vm21, %vm22
  %v24 = vld [vmem:[#allocation2] sm:$0x1]
  %v25 = vsel %vm23, 0, %v24
  %26 = vst [vmem:[#allocation2] sm:$0x1] %v25
  %v27 = vld [vmem:[%s0] sm:$0xf]
  %v28 = vld [vmem:[%s0 + $0x4] sm:$0xf]
  %vm29 = vsmask.f32 4368
  %vm30 = vmor %vm22, %vm29
  %v32 = vshrl.u32 %v27, 16
  %v34 = vrot.slane %v32, 7
  %v35 = vshll.u32 %v27, 16
  %v37 = vor.u32 %v34, %v35
  %v38 = vrot.slane %v34, 4
  %v40 = vshrl.u32 %v28, 16
  %v42 = vrot.slane %v40, 7
  %v43 = vshll.u32 %v28, 16
  %v45 = vor.u32 %v42, %v43
  %v46 = vsel %vm30, %v38, %v45
  %vm49 = vcmask 519168
  %vm50 = vsmask.f32 7938
  %vm51 = vmand %vm49, %vm50
  %v52 = vld [vmem:[#allocation2] sm:$0xf]
  %v53 = vsel %vm51, %v37, %v52
  %54 = vst [vmem:[#allocation2] sm:$0xf] %v53
  %vm55 = vcmask 519168
  %56 = vst.msk [vmem:[#allocation2 + $0x8] sm:$0xf] %vm55, %v46
  %v57 = vld [vmem:[%s0] sm:$0xf]
  %v58 = vld [vmem:[%s0 + $0x4] sm:$0xf]
  %61 = vrot.lane.b32.xlu0 %v57, 64
  %v62 = vpop.permute.xlu0 %61
  %63 = vrot.lane.b32.xlu0 %v58, 64
  %v64 = vpop.permute.xlu0 %63
  %vm67 = vcmask 1043968
  %68 = vst.msk [vmem:[#allocation2] sm:$0xf] %vm67, %v62
  %69 = vst.msk [vmem:[#allocation2 + $0x8] sm:$0xf] %vm67, %v64
  %v70 = vld [vmem:[%s0] sm:$0xf]
  %v71 = vld [vmem:[%s0 + $0x4] sm:$0xf]
  %vm72 = vsmask.f32 3328
  %vm73 = vsmask.f32 7440
  %vm74 = vmor %vm72, %vm73
  %v76 = vshrl.u32 %v70, 16
  %v78 = vrot.slane %v76, 4
  %v79 = vshll.u32 %v70, 16
  %v81 = vrot.slane %v79, 5
  %v82 = vor.u32 %v78, %v81
  %v83 = vrot.slane %v82, 4
  %v85 = vshll.u32 %v71, 16
  %v87 = vrot.slane %v85, 5
  %v88 = vsel %vm74, %v83, %v87
  %v89 = vshrl.u32 %v71, 16
  %v91 = vrot.slane %v89, 4
  %v92 = vor.u32 %v91, %v87
  %v93 = vrot.slane %v92, 4
  %96 = vst.msk [vmem:[#allocation2 + $0x4] sm:$0xf] %vm55, %v88
  %vm97 = vmand %vm49, %vm72
  %v98 = vld [vmem:[#allocation2 + $0xc] sm:$0xf]
  %v99 = vsel %vm97, %v93, %v98
  %100 = vst [vmem:[#allocation2 + $0xc] sm:$0xf] %v99
  %vm101 = vcmask 519171
  %vm102 = vsmask.f32 7950
  %vm103 = vmand %vm101, %vm102
  %v104 = vld [vmem:[#allocation2 + $0xc] sm:$0x8]
  %v105 = vsel %vm103, 0, %v104
  %106 = vst [vmem:[#allocation2 + $0xc] sm:$0x8] %v105
  %v107 = vld [vmem:[#allocation2 + $0x10] sm:$0x1]
  %v108 = vsel %vm23, 0, %v107
  %109 = vst [vmem:[#allocation2 + $0x10] sm:$0x1] %v108
  %s110 = scalar_lea.vmem %s0, 8
  %v111 = vld [vmem:[%s110] sm:$0xf]
  %v112 = vld [vmem:[%s110 + $0x4] sm:$0xf]
  %v114 = vshrl.u32 %v111, 16
  %v116 = vrot.slane %v114, 7
  %v117 = vshll.u32 %v111, 16
  %v119 = vor.u32 %v116, %v117
  %v120 = vrot.slane %v116, 4
  %v122 = vshrl.u32 %v112, 16
  %v124 = vrot.slane %v122, 7
  %v125 = vshll.u32 %v112, 16
  %v127 = vor.u32 %v124, %v125
  %v128 = vsel %vm30, %v120, %v127
  %v131 = vld [vmem:[#allocation2 + $0x10] sm:$0xf]
  %v132 = vsel %vm51, %v119, %v131
  %133 = vst [vmem:[#allocation2 + $0x10] sm:$0xf] %v132
  %134 = vst.msk [vmem:[#allocation2 + $0x18] sm:$0xf] %vm55, %v128
  %v135 = vld [vmem:[%s110] sm:$0xf]
  %v136 = vld [vmem:[%s110 + $0x4] sm:$0xf]
  %139 = vrot.lane.b32.xlu0 %v135, 64
  %v140 = vpop.permute.xlu0 %139
  %141 = vrot.lane.b32.xlu0 %v136, 64
  %v142 = vpop.permute.xlu0 %141
  %145 = vst.msk [vmem:[#allocation2 + $0x10] sm:$0xf] %vm67, %v140
  %146 = vst.msk [vmem:[#allocation2 + $0x18] sm:$0xf] %vm67, %v142
  %v147 = vld [vmem:[%s110] sm:$0xf]
  %v148 = vld [vmem:[%s110 + $0x4] sm:$0xf]
  %v150 = vshrl.u32 %v147, 16
  %v152 = vrot.slane %v150, 4
  %v153 = vshll.u32 %v147, 16
  %v155 = vrot.slane %v153, 5
  %v156 = vor.u32 %v152, %v155
  %v157 = vrot.slane %v156, 4
  %v159 = vshll.u32 %v148, 16
  %v161 = vrot.slane %v159, 5
  %v162 = vsel %vm74, %v157, %v161
  %v163 = vshrl.u32 %v148, 16
  %v165 = vrot.slane %v163, 4
  %v166 = vor.u32 %v165, %v161
  %v167 = vrot.slane %v166, 4
  %170 = vst.msk [vmem:[#allocation2 + $0x14] sm:$0xf] %vm55, %v162
  %v171 = vld [vmem:[#allocation2 + $0x1c] sm:$0xf]
  %v172 = vsel %vm97, %v167, %v171
  %173 = vst [vmem:[#allocation2 + $0x1c] sm:$0xf] %v172
  %v174 = vld [vmem:[#allocation2 + $0x1c] sm:$0x8]
  %v175 = vsel %vm103, 0, %v174
  %176 = vst [vmem:[#allocation2 + $0x1c] sm:$0x8] %v175
  %v177 = vld [vmem:[#allocation2] sm:$0xff]
  %v178 = vld [vmem:[#allocation2 + $0x8] sm:$0xff]
  %v179 = vld [vmem:[#allocation2 + $0x10] sm:$0xff]
  %v180 = vld [vmem:[#allocation2 + $0x18] sm:$0xff]
  %v181 = vld [vmem:[%s1] sm:$0xf]
  %v182 = vld [vmem:[%s1 + $0x4] sm:$0xf]
  %v183 = vld [vmem:[%s1 + $0x8] sm:$0xf]
  %v184 = vld [vmem:[%s1 + $0xc] sm:$0xf]
  %v185 = vld [vmem:[%s1 + $0x10] sm:$0xf]
  %v186 = vld [vmem:[%s1 + $0x14] sm:$0xf]
  %v187 = vld [vmem:[%s1 + $0x18] sm:$0xf]
  %v188 = vld [vmem:[%s1 + $0x1c] sm:$0xf]
  %v189 = vld [vmem:[%s1 + $0x20] sm:$0xf]
  %v190 = vld [vmem:[%s1 + $0x24] sm:$0xf]
  %v191 = vld [vmem:[%s1 + $0x28] sm:$0xf]
  %v192 = vld [vmem:[%s1 + $0x2c] sm:$0xf]
  %v193 = vld [vmem:[%s1 + $0x30] sm:$0xf]
  %v194 = vld [vmem:[%s1 + $0x34] sm:$0xf]
  %v195 = vld [vmem:[%s1 + $0x38] sm:$0xf]
  %v196 = vld [vmem:[%s1 + $0x3c] sm:$0xf]
  %v197 = vld [vmem:[%s1 + $0x40] sm:$0xf]
  %v198 = vld [vmem:[%s1 + $0x44] sm:$0xf]
  %v199 = vld [vmem:[%s1 + $0x48] sm:$0xf]
  %v200 = vld [vmem:[%s1 + $0x4c] sm:$0xf]
  %v201 = vld [vmem:[%s1 + $0x50] sm:$0xf]
  %v202 = vld [vmem:[%s1 + $0x54] sm:$0xf]
  %v203 = vld [vmem:[%s1 + $0x58] sm:$0xf]
  %v204 = vld [vmem:[%s1 + $0x5c] sm:$0xf]
  %v209 = vunpack.c.l.b16 %v177
  %v210 = vunpack.c.h.b16 %v177
  %v211 = vunpack.c.l.b16 %v178
  %v212 = vunpack.c.h.b16 %v178
  %v213 = vunpack.c.l.b16 %v179
  %v214 = vunpack.c.h.b16 %v179
  %v215 = vunpack.c.l.b16 %v180
  %v216 = vunpack.c.h.b16 %v180
  %v217 = vpack.c.b16 %v211, %v209
  %v218 = vpack.c.b16 %v212, %v210
  %v219 = vpack.c.b16 %v215, %v213
  %v220 = vpack.c.b16 %v216, %v214
  %v247 = vunpack.c.l.b16 %v181
  %v248 = vunpack.c.l.b16 %v182
  %v249 = vunpack.c.l.b16 %v183
  %v250 = vunpack.c.l.b16 %v184
  %v251 = vunpack.c.l.b16 %v185
  %v252 = vunpack.c.l.b16 %v186
  %v253 = vunpack.c.l.b16 %v187
  %v254 = vunpack.c.l.b16 %v188
  %v255 = vunpack.c.l.b16 %v189
  %v256 = vunpack.c.l.b16 %v190
  %v257 = vunpack.c.l.b16 %v191
  %v258 = vunpack.c.l.b16 %v192
  %v259 = vunpack.c.l.b16 %v193
  %v260 = vunpack.c.l.b16 %v194
  %v261 = vunpack.c.l.b16 %v195
  %v262 = vunpack.c.l.b16 %v196
  %v263 = vunpack.c.l.b16 %v197
  %v264 = vunpack.c.l.b16 %v198
  %v265 = vunpack.c.l.b16 %v199
  %v266 = vunpack.c.l.b16 %v200
  %v267 = vunpack.c.l.b16 %v201
  %v268 = vunpack.c.l.b16 %v202
  %v269 = vunpack.c.l.b16 %v203
  %v270 = vunpack.c.l.b16 %v204
  %v271 = vpack.c.b16 %v248, %v247
  %v272 = vpack.c.b16 %v250, %v249
  %v273 = vpack.c.b16 %v252, %v251
  %v274 = vpack.c.b16 %v254, %v253
  %v275 = vpack.c.b16 %v256, %v255
  %v276 = vpack.c.b16 %v258, %v257
  %v277 = vpack.c.b16 %v260, %v259
  %v278 = vpack.c.b16 %v262, %v261
  %v279 = vpack.c.b16 %v264, %v263
  %v280 = vpack.c.b16 %v266, %v265
  %v281 = vpack.c.b16 %v268, %v267
  %v282 = vpack.c.b16 %v270, %v269
  %vm295 = vcmask 523264
  %v297 = vsel %vm295, %v218, 0
  %v300 = vsel %vm295, %v220, 0
  %302 = vmatpush.bf16.msra.mxu0 %v278
  %303 = vmatpush.bf16.msra.mxu0 %v277
  %304 = vmatpush.bf16.msra.mxu0 %v276
  %305 = vmatpush.bf16.msra.mxu0 %v275
  %306 = vmatpush.bf16.msra.mxu0 %v274
  %307 = vmatpush.bf16.msra.mxu0 %v273
  %308 = vmatpush.bf16.msra.mxu0 %v272
  %309 = vmatpush.bf16.msra.mxu0 %v271
  %310 = vmatmul.bf16.gmra.mxu0 %v217
  %v311 = vpop.f32.mrf.mxu0
  %v312 = vadd.f32 0.0, %v311
  %v313 = vpop.f32.mrf.mxu0
  %v314 = vadd.f32 0.0, %v313
  %315 = vmatmul.bf16.gmra.mxu0 %v219
  %v316 = vpop.f32.mrf.mxu0
  %v317 = vadd.f32 0.0, %v316
  %v318 = vpop.f32.mrf.mxu0
  %v319 = vadd.f32 0.0, %v318
  %320 = vdwg.mxu0
  %321 = vmatpush.bf16.msra.mxu0 0
  %322 = vmatpush.bf16.msra.mxu0 0
  %323 = vmatpush.bf16.msra.mxu0 0
  %324 = vmatpush.bf16.msra.mxu0 0
  %325 = vmatpush.bf16.msra.mxu0 %v282
  %326 = vmatpush.bf16.msra.mxu0 %v281
  %327 = vmatpush.bf16.msra.mxu0 %v280
  %328 = vmatpush.bf16.msra.mxu0 %v279
  %329 = vmatmul.bf16.gmra.mxu0 %v297
  %v330 = vpop.f32.mrf.mxu0
  %v331 = vadd.f32 %v312, %v330
  %v332 = vpop.f32.mrf.mxu0
  %v333 = vadd.f32 %v314, %v332
  %334 = vmatmul.bf16.gmra.mxu0 %v300
  %v335 = vpop.f32.mrf.mxu0
  %v336 = vadd.f32 %v317, %v335
  %v337 = vpop.f32.mrf.mxu0
  %v338 = vadd.f32 %v319, %v337
  %339 = vdwg.mxu0
  %v340 = vadd.f32 %v331, %v333
  %v341 = vadd.f32 %v340, %v336
  %v342 = vadd.f32 %v341, %v338
  %v343 = vrot.slane %v342, 4
  %v344 = vadd.f32 %v342, %v343
  %v345 = vrot.slane %v344, 2
  %v346 = vadd.f32 %v344, %v345
  %v347 = vrot.slane %v346, 1
  %v348 = vadd.f32 %v346, %v347
  %v349 = vmul.f32 %v331, %v331
  %v350 = vmul.f32 %v333, %v333
  %v351 = vmul.f32 %v336, %v336
  %v352 = vmul.f32 %v338, %v338
  %v353 = vadd.f32 %v349, %v350
  %v354 = vadd.f32 %v353, %v351
  %v355 = vadd.f32 %v354, %v352
  %v356 = vrot.slane %v355, 4
  %v357 = vadd.f32 %v355, %v356
  %v358 = vrot.slane %v357, 2
  %v359 = vadd.f32 %v357, %v358
  %v360 = vrot.slane %v359, 1
  %v361 = vadd.f32 %v359, %v360
  %v362 = vld [vmem:[%s2] sm:$0xff]
  %v363 = vld [vmem:[%s2 + $0x8] sm:$0xff]
  %v364 = vld [vmem:[%s2 + $0x10] sm:$0xff]
  %v365 = vld [vmem:[%s2 + $0x18] sm:$0xff]
  %v366 = vld [vmem:[%s2 + $0x20] sm:$0xff]
  %v367 = vld [vmem:[%s2 + $0x28] sm:$0xff]
  %v368 = vld [vmem:[%s2 + $0x30] sm:$0xff]
  %v369 = vld [vmem:[%s2 + $0x38] sm:$0xff]
  %v370 = vld [vmem:[%s2 + $0x40] sm:$0xff]
  %v371 = vld [vmem:[%s2 + $0x48] sm:$0xff]
  %v372 = vld [vmem:[%s2 + $0x50] sm:$0xff]
  %v373 = vld [vmem:[%s2 + $0x58] sm:$0xff]
  %v374 = vld [vmem:[%s2 + $0x60] sm:$0xff]
  %v375 = vld [vmem:[%s2 + $0x68] sm:$0xff]
  %v376 = vld [vmem:[%s2 + $0x70] sm:$0xff]
  %v377 = vld [vmem:[%s2 + $0x78] sm:$0xff]
  %378 = vmatpush.msra.mxu0 %v377
  %379 = vmatpush.msra.mxu0 %v376
  %380 = vmatpush.msra.mxu0 %v375
  %381 = vmatpush.msra.mxu0 %v374
  %382 = vmatpush.msra.mxu0 %v373
  %383 = vmatpush.msra.mxu0 %v372
  %384 = vmatpush.msra.mxu0 %v371
  %385 = vmatpush.msra.mxu0 %v370
  %386 = vmatpush.msra.mxu0 %v369
  %387 = vmatpush.msra.mxu0 %v368
  %388 = vmatpush.msra.mxu0 %v367
  %389 = vmatpush.msra.mxu0 %v366
  %390 = vmatpush.msra.mxu0 %v365
  %391 = vmatpush.msra.mxu0 %v364
  %392 = vmatpush.msra.mxu0 %v363
  %393 = vmatpush.msra.mxu0 %v362
  %394 = vmatmul.f32.gmra.mxu0 %v348
  %v395 = vpop.f32.mrf.mxu0
  %v396 = vadd.f32 0.0, %v395
  %397 = vdwg.mxu0
  %398 = vmatpush.msra.mxu0 %v377
  %399 = vmatpush.msra.mxu0 %v376
  %400 = vmatpush.msra.mxu0 %v375
  %401 = vmatpush.msra.mxu0 %v374
  %402 = vmatpush.msra.mxu0 %v373
  %403 = vmatpush.msra.mxu0 %v372
  %404 = vmatpush.msra.mxu0 %v371
  %405 = vmatpush.msra.mxu0 %v370
  %406 = vmatpush.msra.mxu0 %v369
  %407 = vmatpush.msra.mxu0 %v368
  %408 = vmatpush.msra.mxu0 %v367
  %409 = vmatpush.msra.mxu0 %v366
  %410 = vmatpush.msra.mxu0 %v365
  %411 = vmatpush.msra.mxu0 %v364
  %412 = vmatpush.msra.mxu0 %v363
  %413 = vmatpush.msra.mxu0 %v362
  %414 = vmatmul.f32.gmra.mxu0 %v361
  %v415 = vpop.f32.mrf.mxu0
  %v416 = vadd.f32 0.0, %v415
  %417 = vdwg.mxu0
  %v418 = vmul.f32 %v396, 0.001953125
  %v419 = vmul.f32 %v416, 0.001953125
  %v420 = vmul.f32 %v418, %v418
  %v421 = vsub.f32 %v419, %v420
  %v422 = vmax.f32 %v421, 0.0
  %v423 = vadd.f32 %v422, 1e-05
  %v424 = vrsqrt.pop %v423
  %v425 = vmul.f32 %v424, %v423
  %v426 = vmul.f32 %v425, %v424
  %v427 = vmul.f32 0.5, %v426
  %v428 = vsub.f32 1.5, %v427
  %v429 = vmul.f32 %v424, %v428
  %vm430 = vweird.f32 %v423
  %vm431 = vweird.f32 %v424
  %vm432 = vmor %vm430, %vm431
  %v433 = vsel %vm432, %v424, %v429
  %v434 = vld [vmem:[%s3] sm:$0x1]
  %v435 = vmul.f32 %v434, %v433
  %v436 = vld [vmem:[%s4] sm:$0x1]
  %v437 = vmul.f32 %v418, %v435
  %v438 = vsub.f32 %v436, %v437
  %v440 = vperm.slane %v435, 0
  %v442 = vmul.f32 %v331, %v440
  %v443 = vmul.f32 %v333, %v440
  %v444 = vmul.f32 %v336, %v440
  %v445 = vmul.f32 %v338, %v440
  %v447 = vperm.slane %v438, 0
  %v449 = vadd.f32 %v442, %v447
  %v450 = vadd.f32 %v443, %v447
  %v451 = vadd.f32 %v444, %v447
  %v452 = vadd.f32 %v445, %v447
  %v453 = vmax.f32 %v449, 0.0
  %v454 = vmax.f32 %v450, 0.0
  %v455 = vmax.f32 %v451, 0.0
  %v456 = vmax.f32 %v452, 0.0
  %457 = vst [vmem:[%s5] sm:$0xff] %v453
  %458 = vst [vmem:[%s5 + $0x8] sm:$0xff] %v454
  %459 = vst [vmem:[%s5 + $0x10] sm:$0xff] %v455
  %460 = vst [vmem:[%s5 + $0x18] sm:$0xff] %v456
  // Predicated region
  $region22: #{conv_bn_relu.1} parent=0 // pred_check
    _
  $region23: #{conv_bn_relu.1} parent=0 // pred_check_branch
    %462 = sbr.rel (0) target = $region25
  $region24: #{conv_bn_relu.1} parent=0 // pred_region
    _
  $region25: #{conv_bn_relu.1} parent=0 // pred_fallthru
    _
  // Predicated region
  $region26: #{conv_bn_relu.1} parent=0 // pred_check
    _
  $region27: #{conv_bn_relu.1} parent=0 // pred_check_branch
    %464 = sbr.rel (0) target = $region29
  $region28: #{conv_bn_relu.1} parent=0 // pred_region
    _
  $region29: #{conv_bn_relu.1} parent=0 // pred_fallthru
    _

</llo_original>
